<compile_context>
chip_gen: v5e
topology: v5e:2x2
jax: 0.10.0
libtpu: 0.0.40
codegen_flags: <defaults>
</compile_context>

<pallas_src>
import math
import functools

import jax
import jax.numpy as jnp
from jax.experimental import pallas as pl
from jax.experimental.pallas import tpu as pltpu


def _round_up(x: int, m: int) -> int:
    return ((x + m - 1) // m) * m


def _pick_tile(dim_pad: int, cap: int) -> int:
    """Largest multiple of 128 that divides dim_pad and is <= cap."""
    if dim_pad <= cap:
        return dim_pad
    best, t = 128, 256
    while t <= cap:
        if dim_pad % t == 0:
            best = t
        t += 128
    return best


def _plan_node_tiles(n: int):
    """Padded node count + (row tile tm, adj-reduction tile tk), decoupled."""
    n_pad = _round_up(n, 128)
    tm = _pick_tile(n_pad, 1024)
    # If the 128-lattice only admits small tiles for a big graph, move to the
    # 512 lattice instead (waste bounded at 511 dead rows/cols).
    if n_pad > 1024 and tm < 512:
        n_pad = _round_up(n, 512)
        tm = _pick_tile(n_pad, 1024)
    tk = _pick_tile(n_pad, 512)
    # v7x megacore: make sure the "parallel" i axis has >= 2 tiles when each
    # half is still a large (>=512) tile.  No effect on single-TC v5e/v6e.
    if n_pad // tm == 1 and n_pad >= 1024 and n_pad % 256 == 0:
        tm = n_pad // 2
    return n_pad, tm, tk


# ---------------------------------------------------------------------------
# Kernels.  Reduction axis is the last grid axis; output block index ignores
# it, so the output block stays resident across the reduction.
# ---------------------------------------------------------------------------
def _matmul_accout_kernel(a_ref, b_ref, o_ref):
    """f32 output: accumulate directly into o_ref (no scratch, no finalize copy)."""
    @pl.when(pl.program_id(2) == 0)
    def _init():
        o_ref[...] = jnp.zeros_like(o_ref)

    o_ref[...] += jnp.dot(a_ref[...], b_ref[...],
                          preferred_element_type=jnp.float32)


def _matmul_bias_accout_kernel(a_ref, b_ref, bias_ref, o_ref):
    @pl.when(pl.program_id(2) == 0)
    def _init():
        o_ref[...] = jnp.zeros_like(o_ref)

    o_ref[...] += jnp.dot(a_ref[...], b_ref[...],
                          preferred_element_type=jnp.float32)

    @pl.when(pl.program_id(2) == pl.num_programs(2) - 1)
    def _finalize():
        o_ref[...] += bias_ref[...].astype(jnp.float32)


def _matmul_scratch_kernel(a_ref, b_ref, o_ref, acc_ref):
    """Non-f32 output (e.g. bf16 support): f32 scratch accumulator + cast."""
    @pl.when(pl.program_id(2) == 0)
    def _init():
        acc_ref[...] = jnp.zeros_like(acc_ref)

    acc_ref[...] += jnp.dot(a_ref[...], b_ref[...],
                            preferred_element_type=jnp.float32)

    @pl.when(pl.program_id(2) == pl.num_programs(2) - 1)
    def _finalize():
        o_ref[...] = acc_ref[...].astype(o_ref.dtype)


def _matmul_bias_scratch_kernel(a_ref, b_ref, bias_ref, o_ref, acc_ref):
    @pl.when(pl.program_id(2) == 0)
    def _init():
        acc_ref[...] = jnp.zeros_like(acc_ref)

    acc_ref[...] += jnp.dot(a_ref[...], b_ref[...],
                            preferred_element_type=jnp.float32)

    @pl.when(pl.program_id(2) == pl.num_programs(2) - 1)
    def _finalize():
        o_ref[...] = (acc_ref[...] + bias_ref[...]).astype(o_ref.dtype)


def _tiled_matmul(a, b, bias=None, *, tm, tn, tk, out_dtype):
    """a:[M,K] @ b:[K,N] (+ bias:[1,N]).  Tile sizes must divide the dims."""
    M, K = a.shape
    K2, N = b.shape
    assert K == K2
    assert M % tm == 0 and N % tn == 0 and K % tk == 0

    grid = (M // tm, N // tn, K // tk)
    f32_out = jnp.dtype(out_dtype) == jnp.dtype(jnp.float32)

    in_specs = [
        pl.BlockSpec((tm, tk), lambda i, j, k: (i, k)),
        pl.BlockSpec((tk, tn), lambda i, j, k: (k, j)),
    ]
    args = (a, b)
    if bias is not None:
        in_specs.append(pl.BlockSpec((1, tn), lambda i, j, k: (0, j)))
        args = (a, b, bias)
        kernel = _matmul_bias_accout_kernel if f32_out else _matmul_bias_scratch_kernel
    else:
        kernel = _matmul_accout_kernel if f32_out else _matmul_scratch_kernel

    scratch = [] if f32_out else [pltpu.VMEM((tm, tn), jnp.float32)]

    return pl.pallas_call(
        kernel,
        out_shape=jax.ShapeDtypeStruct((M, N), out_dtype),
        grid_spec=pltpu.PrefetchScalarGridSpec(
            num_scalar_prefetch=0,
            grid=grid,
            in_specs=in_specs,
            out_specs=pl.BlockSpec((tm, tn), lambda i, j, k: (i, j)),
            scratch_shapes=scratch,
        ),
        compiler_params=pltpu.CompilerParams(
            # Row / col tiles independent -> parallel (megacore on v7x);
            # reduction axis last + "arbitrary" (output/acc carried).
            dimension_semantics=("parallel", "parallel", "arbitrary"),
            # No vmem_limit override: tiles here use < ~12 MiB double-buffered,
            # well under the default scoped budget on every generation, and a
            # 64 MiB cap would equal v7x's entire per-TC VMEM.
        ),
    )(*args)


@functools.partial(jax.jit, static_argnames=("bf16_matmul",))
def prepare_adj(adj, *, bf16_matmul=False):
    """Pad + cast the (reused) adjacency once, off the per-layer hot path."""
    n = adj.shape[0]
    n_pad, _, _ = _plan_node_tiles(n)
    mm_dtype = jnp.bfloat16 if bf16_matmul else jnp.float32
    return jnp.pad(adj, ((0, n_pad - n), (0, n_pad - n))).astype(mm_dtype)


@functools.partial(jax.jit, static_argnames=("use_bias", "bf16_matmul"))
def graph_convolution(x, adj, weight, bias=None, *, use_bias=True,
                      bf16_matmul=False):
    """GCN layer forward: adj @ (x @ weight) (+ bias).

    `adj` may be the raw (n, n) adjacency or the output of `prepare_adj`
    (already padded/cast, avoiding an extra HBM pass per layer).
    `bf16_matmul=True` is an opt-in perf mode (bf16 MXU operands, f32 accum).
    """
    n, f_in = x.shape
    f_out = weight.shape[1]
    out_dtype = x.dtype
    has_bias = use_bias and (bias is not None)
    mm_dtype = jnp.bfloat16 if bf16_matmul else jnp.float32

    # ---- tile planning -------------------------------------------------
    n_pad, tm, tk = _plan_node_tiles(n)
    fin_pad = _round_up(f_in, 128)
    fin_tile = _pick_tile(fin_pad, 512)
    fout_pad = _round_up(f_out, 128)
    fout_tile = _pick_tile(fout_pad, 512)   # lane-dense, cap raised to 512

    # ---- operands ------------------------------------------------------
    x_p = jnp.pad(x, ((0, n_pad - n), (0, fin_pad - f_in))).astype(mm_dtype)
    w_p = jnp.pad(weight,
                  ((0, fin_pad - f_in), (0, fout_pad - f_out))).astype(mm_dtype)

    if adj.shape == (n_pad, n_pad):
        adj_p = adj.astype(mm_dtype)        # pre-prepared: no pad pass
    else:
        assert adj.shape == (n, n)
        adj_p = jnp.pad(adj, ((0, n_pad - n), (0, n_pad - n))).astype(mm_dtype)

    # support = X @ W (computed once).  In bf16 mode keep it bf16 so the
    # second matmul re-reads half the bytes; in f32 mode keep f32.
    support_p = _tiled_matmul(x_p, w_p, tm=tm, tn=fout_tile, tk=fin_tile,
                              out_dtype=mm_dtype)

    # output = adj @ support (+ bias), bias fused into the last k step.
    if has_bias:
        bias_p = jnp.pad(bias.astype(jnp.float32).reshape(1, f_out),
                         ((0, 0), (0, fout_pad - f_out)))
        out_p = _tiled_matmul(adj_p, support_p, bias_p,
                              tm=tm, tn=fout_tile, tk=tk, out_dtype=out_dtype)
    else:
        out_p = _tiled_matmul(adj_p, support_p,
                              tm=tm, tn=fout_tile, tk=tk, out_dtype=out_dtype)

    return out_p[:n, :f_out]


def init_gcn_params(key, in_features, out_features, bias=True):
    """Matches PyTorch reset_parameters: uniform(-stdv, stdv), stdv=1/sqrt(F_out)."""
    stdv = 1.0 / math.sqrt(out_features)
    k_w, k_b = jax.random.split(key)
    weight = jax.random.uniform(
        k_w, (in_features, out_features), jnp.float32, minval=-stdv, maxval=stdv)
    b = None
    if bias:
        b = jax.random.uniform(
            k_b, (out_features,), jnp.float32, minval=-stdv, maxval=stdv)
    return weight, b


if __name__ == "__main__":
    key = jax.random.PRNGKey(0)
    k_x, k_adj, k_param = jax.random.split(key, 3)

    N = 64      # graph nodes
    F_IN = 32   # in_features
    F_OUT = 32  # out_features

    # node features
    x = jax.random.normal(k_x, (N, F_IN), jnp.float32)

    # symmetric row-normalized dense adjacency with self loops
    a_raw = (jax.random.uniform(k_adj, (N, N)) < 0.1).astype(jnp.float32)
    a_sym = jnp.maximum(a_raw, a_raw.T) + jnp.eye(N, dtype=jnp.float32)
    adj = a_sym / jnp.sum(a_sym, axis=1, keepdims=True)

    weight, bias = init_gcn_params(k_param, F_IN, F_OUT, bias=True)

    # ---- default f32-faithful path --------------------------------------
    out = graph_convolution(x, adj, weight, bias, use_bias=True)
    out = jax.block_until_ready(out)
    assert out.shape == (N, F_OUT)
    ref_f32 = adj @ (x @ weight) + bias[None, :]
    assert jnp.allclose(out, ref_f32, atol=1e-3, rtol=1e-3)

    # prepared (pre-padded) adjacency: same result, no in-call pad/cast pass
    adj_prep = prepare_adj(adj)
    out_prep = graph_convolution(x, adj_prep, weight, bias, use_bias=True)
    out_prep = jax.block_until_ready(out_prep)
    assert jnp.allclose(out_prep, out, atol=1e-5, rtol=1e-5)

    # ---- opt-in bf16 perf mode ------------------------------------------
    adj_prep_bf16 = prepare_adj(adj, bf16_matmul=True)
    out_bf16 = graph_convolution(x, adj_prep_bf16, weight, bias,
                                 use_bias=True, bf16_matmul=True)
    out_bf16 = jax.block_until_ready(out_bf16)
    xb = x.astype(jnp.bfloat16).astype(jnp.float32)
    wb = weight.astype(jnp.bfloat16).astype(jnp.float32)
    ab = adj.astype(jnp.bfloat16).astype(jnp.float32)
    support_ref = (xb @ wb).astype(jnp.bfloat16).astype(jnp.float32)
    ref_bf16 = ab @ support_ref + bias[None, :]
    assert jnp.allclose(out_bf16, ref_bf16, atol=2e-3, rtol=2e-3)
    assert jnp.allclose(out_bf16, ref_f32, atol=5e-2, rtol=5e-2)

    # ---- no-bias path ----------------------------------------------------
    out_nb = graph_convolution(x, adj, weight, None, use_bias=False)
    out_nb = jax.block_until_ready(out_nb)
    assert jnp.allclose(out_nb, adj @ (x @ weight), atol=1e-3, rtol=1e-3)

    print("KERNEL_OK")
</pallas_src>

<mosaic_0001>
module attributes {stable_mosaic.version = 11 : i64} {
  func.func @_matmul_accout_kernel(%arg0: i32, %arg1: i32, %arg2: i32, %arg3: memref<128x128xf32, #tpu.memory_space<vmem>>, %arg4: memref<128x128xf32, #tpu.memory_space<vmem>>, %arg5: memref<128x128xf32, #tpu.memory_space<vmem>>) attributes {dimension_semantics = [#tpu.dimension_semantics<parallel>, #tpu.dimension_semantics<parallel>, #tpu.dimension_semantics<arbitrary>], iteration_bounds = array<i64: 1, 1, 1>, scalar_prefetch = 0 : i64, scratch_operands = 0 : i64, tpu.core_type = #tpu.core_type<tc>, window_params = [{transform_indices = @transform_0, window_bounds = array<i64: 128, 128>}, {transform_indices = @transform_1, window_bounds = array<i64: 128, 128>}, {transform_indices = @transform_2, window_bounds = array<i64: 128, 128>}]} {
    %c0_i32 = arith.constant 0 : i32
    %0 = arith.cmpi eq, %arg2, %c0_i32 : i32
    %1 = arith.extui %0 : i1 to i32
    %c0_i32_0 = arith.constant 0 : i32
    %2 = arith.cmpi ne, %1, %c0_i32_0 : i32
    scf.if %2 {
      %cst_8 = arith.constant 0.000000e+00 : f32
      %9 = vector.broadcast %cst_8 : f32 to vector<128x128xf32>
      %c0_9 = arith.constant 0 : index
      %c0_10 = arith.constant 0 : index
      %10 = vector.load %arg5[%c0_9, %c0_10] : memref<128x128xf32, #tpu.memory_space<vmem>>, vector<128x128xf32>
      tpu.vector_store %arg5[%c0_9, %c0_10], %9 {strides = array<i32>} : memref<128x128xf32, #tpu.memory_space<vmem>>, vector<128x128xf32>,
    } else {
    }
    %c0 = arith.constant 0 : index
    %c0_1 = arith.constant 0 : index
    %3 = vector.load %arg5[%c0, %c0_1] : memref<128x128xf32, #tpu.memory_space<vmem>>, vector<128x128xf32>
    %c0_2 = arith.constant 0 : index
    %c0_3 = arith.constant 0 : index
    %4 = vector.load %arg3[%c0_2, %c0_3] : memref<128x128xf32, #tpu.memory_space<vmem>>, vector<128x128xf32>
    %c0_4 = arith.constant 0 : index
    %c0_5 = arith.constant 0 : index
    %5 = vector.load %arg4[%c0_4, %c0_5] : memref<128x128xf32, #tpu.memory_space<vmem>>, vector<128x128xf32>
    %cst = arith.constant dense<0.000000e+00> : vector<128x128xf32>
    %6 = tpu.matmul %4, %5, %cst {dimension_numbers = #tpu.dot_dimension_numbers<[1], [0], [0], [1], [0, 0, 1, 1], [], []>} : vector<128x128xf32>, vector<128x128xf32>, vector<128x128xf32> -> vector<128x128xf32>
    %7 = arith.addf %3, %6 : vector<128x128xf32>
    %c0_6 = arith.constant 0 : index
    %c0_7 = arith.constant 0 : index
    %8 = vector.load %arg5[%c0_6, %c0_7] : memref<128x128xf32, #tpu.memory_space<vmem>>, vector<128x128xf32>
    tpu.vector_store %arg5[%c0_6, %c0_7], %7 {strides = array<i32>} : memref<128x128xf32, #tpu.memory_space<vmem>>, vector<128x128xf32>,
    return
  }
  func.func @transform_0(%arg0: i32, %arg1: i32, %arg2: i32) -> (i32, i32) {
    %c0_i32 = arith.constant 0 : i32
    return %arg0, %arg2 : i32, i32
  }
  func.func @transform_1(%arg0: i32, %arg1: i32, %arg2: i32) -> (i32, i32) {
    %c0_i32 = arith.constant 0 : i32
    return %arg2, %arg1 : i32, i32
  }
  func.func @transform_2(%arg0: i32, %arg1: i32, %arg2: i32) -> (i32, i32) {
    %c0_i32 = arith.constant 0 : i32
    return %arg0, %arg1 : i32, i32
  }
}

module attributes {stable_mosaic.version = 11 : i64} {
  func.func @_matmul_bias_accout_kernel(%arg0: i32, %arg1: i32, %arg2: i32, %arg3: memref<128x128xf32, #tpu.memory_space<vmem>>, %arg4: memref<128x128xf32, #tpu.memory_space<vmem>>, %arg5: memref<1x128xf32, #tpu.memory_space<vmem>>, %arg6: memref<128x128xf32, #tpu.memory_space<vmem>>) attributes {dimension_semantics = [#tpu.dimension_semantics<parallel>, #tpu.dimension_semantics<parallel>, #tpu.dimension_semantics<arbitrary>], iteration_bounds = array<i64: 1, 1, 1>, scalar_prefetch = 0 : i64, scratch_operands = 0 : i64, tpu.core_type = #tpu.core_type<tc>, window_params = [{transform_indices = @transform_0, window_bounds = array<i64: 128, 128>}, {transform_indices = @transform_1, window_bounds = array<i64: 128, 128>}, {transform_indices = @transform_2, window_bounds = array<i64: 1, 128>}, {transform_indices = @transform_3, window_bounds = array<i64: 128, 128>}]} {
    %c0_i32 = arith.constant 0 : i32
    %0 = arith.cmpi eq, %arg2, %c0_i32 : i32
    %1 = arith.extui %0 : i1 to i32
    %c0_i32_0 = arith.constant 0 : i32
    %2 = arith.cmpi ne, %1, %c0_i32_0 : i32
    scf.if %2 {
      %cst_10 = arith.constant 0.000000e+00 : f32
      %12 = vector.broadcast %cst_10 : f32 to vector<128x128xf32>
      %c0_11 = arith.constant 0 : index
      %c0_12 = arith.constant 0 : index
      %13 = vector.load %arg6[%c0_11, %c0_12] : memref<128x128xf32, #tpu.memory_space<vmem>>, vector<128x128xf32>
      tpu.vector_store %arg6[%c0_11, %c0_12], %12 {strides = array<i32>} : memref<128x128xf32, #tpu.memory_space<vmem>>, vector<128x128xf32>,
    } else {
    }
    %c0 = arith.constant 0 : index
    %c0_1 = arith.constant 0 : index
    %3 = vector.load %arg6[%c0, %c0_1] : memref<128x128xf32, #tpu.memory_space<vmem>>, vector<128x128xf32>
    %c0_2 = arith.constant 0 : index
    %c0_3 = arith.constant 0 : index
    %4 = vector.load %arg3[%c0_2, %c0_3] : memref<128x128xf32, #tpu.memory_space<vmem>>, vector<128x128xf32>
    %c0_4 = arith.constant 0 : index
    %c0_5 = arith.constant 0 : index
    %5 = vector.load %arg4[%c0_4, %c0_5] : memref<128x128xf32, #tpu.memory_space<vmem>>, vector<128x128xf32>
    %cst = arith.constant dense<0.000000e+00> : vector<128x128xf32>
    %6 = tpu.matmul %4, %5, %cst {dimension_numbers = #tpu.dot_dimension_numbers<[1], [0], [0], [1], [0, 0, 1, 1], [], []>} : vector<128x128xf32>, vector<128x128xf32>, vector<128x128xf32> -> vector<128x128xf32>
    %7 = arith.addf %3, %6 : vector<128x128xf32>
    %c0_6 = arith.constant 0 : index
    %c0_7 = arith.constant 0 : index
    %8 = vector.load %arg6[%c0_6, %c0_7] : memref<128x128xf32, #tpu.memory_space<vmem>>, vector<128x128xf32>
    tpu.vector_store %arg6[%c0_6, %c0_7], %7 {strides = array<i32>} : memref<128x128xf32, #tpu.memory_space<vmem>>, vector<128x128xf32>,
    %c0_i32_8 = arith.constant 0 : i32
    %9 = arith.cmpi eq, %arg2, %c0_i32_8 : i32
    %10 = arith.extui %9 : i1 to i32
    %c0_i32_9 = arith.constant 0 : i32
    %11 = arith.cmpi ne, %10, %c0_i32_9 : i32
    scf.if %11 {
      %c0_10 = arith.constant 0 : index
      %c0_11 = arith.constant 0 : index
      %12 = vector.load %arg6[%c0_10, %c0_11] : memref<128x128xf32, #tpu.memory_space<vmem>>, vector<128x128xf32>
      %c0_12 = arith.constant 0 : index
      %c0_13 = arith.constant 0 : index
      %13 = vector.load %arg5[%c0_12, %c0_13] : memref<1x128xf32, #tpu.memory_space<vmem>>, vector<1x128xf32>
      %14 = vector.broadcast %13 : vector<1x128xf32> to vector<128x128xf32>
      %15 = arith.addf %12, %14 : vector<128x128xf32>
      %c0_14 = arith.constant 0 : index
      %c0_15 = arith.constant 0 : index
      %16 = vector.load %arg6[%c0_14, %c0_15] : memref<128x128xf32, #tpu.memory_space<vmem>>, vector<128x128xf32>
      tpu.vector_store %arg6[%c0_14, %c0_15], %15 {strides = array<i32>} : memref<128x128xf32, #tpu.memory_space<vmem>>, vector<128x128xf32>,
    } else {
    }
    return
  }
  func.func @transform_0(%arg0: i32, %arg1: i32, %arg2: i32) -> (i32, i32) {
    %c0_i32 = arith.constant 0 : i32
    return %arg0, %arg2 : i32, i32
  }
  func.func @transform_1(%arg0: i32, %arg1: i32, %arg2: i32) -> (i32, i32) {
    %c0_i32 = arith.constant 0 : i32
    return %arg2, %arg1 : i32, i32
  }
  func.func @transform_2(%arg0: i32, %arg1: i32, %arg2: i32) -> (i32, i32) {
    %c0_i32 = arith.constant 0 : i32
    %c0_i32_0 = arith.constant 0 : i32
    return %c0_i32, %arg1 : i32, i32
  }
  func.func @transform_3(%arg0: i32, %arg1: i32, %arg2: i32) -> (i32, i32) {
    %c0_i32 = arith.constant 0 : i32
    return %arg0, %arg1 : i32, i32
  }
}

</mosaic_0001>

<llo_original>
// kernel: graph_convolution.2
$region0: #{graph_convolution.2}
  #allocation0 [shape = 'u32[]', space=smem, size = 0x4, offset = 0x4, fixed_abs, tag = 'smem constant byte address 0x4 - core index']
  #allocation1 [shape = 'u32[72,128]{1,0:T(1,128)}', space=vmem, size = 0x9000, scoped, tag = 'internal scratch']
  %s0 = inlined_call_operand.vmem [shape: f32[128,128], index: 0, kind: input, shape index: {}]
  %s1 = inlined_call_operand.vmem [shape: f32[128,128], index: 1, kind: input, shape index: {}]
  %s2 = inlined_call_operand.vmem [shape: f32[128,128], index: 2, kind: output, shape index: {}]
  %s3 = sld [smem:[#allocation0]]
  $region22: #{graph_convolution.2} parent=0
    _
  %s5 = ssub.s32 1, %s3
  %s6 = scalar_select 0, %s5, %s3
  // Predicated region
  $region2: #{graph_convolution.2} parent=0 // pred_check
    _
  $region3: #{graph_convolution.2} parent=0 // pred_check_branch
    %8 = sbr.rel (0) target = $region5
  $region4: #{graph_convolution.2} parent=0 // pred_region
    _
  $region5: #{graph_convolution.2} parent=0 // pred_fallthru
    _
  // Predicated region
  $region6: #{graph_convolution.2} parent=0 // pred_check
    _
  $region7: #{graph_convolution.2} parent=0 // pred_check_branch
    %10 = sbr.rel (0) target = $region9
  $region8: #{graph_convolution.2} parent=0 // pred_region
    _
  $region9: #{graph_convolution.2} parent=0 // pred_fallthru
    _
  %p11 = scmp.eq.s32.totalorder 0, 0
  // Predicated region
  $region10: #{graph_convolution.2} parent=0 // pred_check
    %p12 = pneg %p11
  $region11: #{graph_convolution.2} parent=0 // pred_check_branch
    %14 = sbr.rel (%p12) target = $region13
  $region12: #{graph_convolution.2} parent=0 // pred_region
    %15 = vst [vmem:[%s2] sm:$0xff] 0.0
    %16 = vst [vmem:[%s2 + $0x8] sm:$0xff] 0.0
    %17 = vst [vmem:[%s2 + $0x10] sm:$0xff] 0.0
    %18 = vst [vmem:[%s2 + $0x18] sm:$0xff] 0.0
    %19 = vst [vmem:[%s2 + $0x20] sm:$0xff] 0.0
    %20 = vst [vmem:[%s2 + $0x28] sm:$0xff] 0.0
    %21 = vst [vmem:[%s2 + $0x30] sm:$0xff] 0.0
    %22 = vst [vmem:[%s2 + $0x38] sm:$0xff] 0.0
    %23 = vst [vmem:[%s2 + $0x40] sm:$0xff] 0.0
    %24 = vst [vmem:[%s2 + $0x48] sm:$0xff] 0.0
    %25 = vst [vmem:[%s2 + $0x50] sm:$0xff] 0.0
    %26 = vst [vmem:[%s2 + $0x58] sm:$0xff] 0.0
    %27 = vst [vmem:[%s2 + $0x60] sm:$0xff] 0.0
    %28 = vst [vmem:[%s2 + $0x68] sm:$0xff] 0.0
    %29 = vst [vmem:[%s2 + $0x70] sm:$0xff] 0.0
    %30 = vst [vmem:[%s2 + $0x78] sm:$0xff] 0.0
  $region13: #{graph_convolution.2} parent=0 // pred_fallthru
    _
  %v31 = vld [vmem:[%s2] sm:$0xff]
  %v32 = vld [vmem:[%s2 + $0x8] sm:$0xff]
  %v33 = vld [vmem:[%s2 + $0x10] sm:$0xff]
  %v34 = vld [vmem:[%s2 + $0x18] sm:$0xff]
  %v35 = vld [vmem:[%s2 + $0x20] sm:$0xff]
  %v36 = vld [vmem:[%s2 + $0x28] sm:$0xff]
  %v37 = vld [vmem:[%s2 + $0x30] sm:$0xff]
  %v38 = vld [vmem:[%s2 + $0x38] sm:$0xff]
  %v39 = vld [vmem:[%s2 + $0x40] sm:$0xff]
  %v40 = vld [vmem:[%s2 + $0x48] sm:$0xff]
  %v41 = vld [vmem:[%s2 + $0x50] sm:$0xff]
  %v42 = vld [vmem:[%s2 + $0x58] sm:$0xff]
  %v43 = vld [vmem:[%s2 + $0x60] sm:$0xff]
  %v44 = vld [vmem:[%s2 + $0x68] sm:$0xff]
  %v45 = vld [vmem:[%s2 + $0x70] sm:$0xff]
  %v46 = vld [vmem:[%s2 + $0x78] sm:$0xff]
  %v47 = vld [vmem:[%s0] sm:$0xff]
  %v48 = vld [vmem:[%s0 + $0x8] sm:$0xff]
  %v49 = vld [vmem:[%s0 + $0x10] sm:$0xff]
  %v50 = vld [vmem:[%s0 + $0x18] sm:$0xff]
  %v51 = vld [vmem:[%s0 + $0x20] sm:$0xff]
  %v52 = vld [vmem:[%s0 + $0x28] sm:$0xff]
  %v53 = vld [vmem:[%s0 + $0x30] sm:$0xff]
  %v54 = vld [vmem:[%s0 + $0x38] sm:$0xff]
  %v55 = vld [vmem:[%s0 + $0x40] sm:$0xff]
  %v56 = vld [vmem:[%s0 + $0x48] sm:$0xff]
  %v57 = vld [vmem:[%s0 + $0x50] sm:$0xff]
  %v58 = vld [vmem:[%s0 + $0x58] sm:$0xff]
  %v59 = vld [vmem:[%s0 + $0x60] sm:$0xff]
  %v60 = vld [vmem:[%s0 + $0x68] sm:$0xff]
  %v61 = vld [vmem:[%s0 + $0x70] sm:$0xff]
  %v62 = vld [vmem:[%s0 + $0x78] sm:$0xff]
  %v63 = vld [vmem:[%s1] sm:$0xff]
  %v64 = vld [vmem:[%s1 + $0x8] sm:$0xff]
  %v65 = vld [vmem:[%s1 + $0x10] sm:$0xff]
  %v66 = vld [vmem:[%s1 + $0x18] sm:$0xff]
  %v67 = vld [vmem:[%s1 + $0x20] sm:$0xff]
  %v68 = vld [vmem:[%s1 + $0x28] sm:$0xff]
  %v69 = vld [vmem:[%s1 + $0x30] sm:$0xff]
  %v70 = vld [vmem:[%s1 + $0x38] sm:$0xff]
  %v71 = vld [vmem:[%s1 + $0x40] sm:$0xff]
  %v72 = vld [vmem:[%s1 + $0x48] sm:$0xff]
  %v73 = vld [vmem:[%s1 + $0x50] sm:$0xff]
  %v74 = vld [vmem:[%s1 + $0x58] sm:$0xff]
  %v75 = vld [vmem:[%s1 + $0x60] sm:$0xff]
  %v76 = vld [vmem:[%s1 + $0x68] sm:$0xff]
  %v77 = vld [vmem:[%s1 + $0x70] sm:$0xff]
  %v78 = vld [vmem:[%s1 + $0x78] sm:$0xff]
  %79 = vmatpush.msra.mxu0 %v78
  %80 = vmatpush.msra.mxu0 %v77
  %81 = vmatpush.msra.mxu0 %v76
  %82 = vmatpush.msra.mxu0 %v75
  %83 = vmatpush.msra.mxu0 %v74
  %84 = vmatpush.msra.mxu0 %v73
  %85 = vmatpush.msra.mxu0 %v72
  %86 = vmatpush.msra.mxu0 %v71
  %87 = vmatpush.msra.mxu0 %v70
  %88 = vmatpush.msra.mxu0 %v69
  %89 = vmatpush.msra.mxu0 %v68
  %90 = vmatpush.msra.mxu0 %v67
  %91 = vmatpush.msra.mxu0 %v66
  %92 = vmatpush.msra.mxu0 %v65
  %93 = vmatpush.msra.mxu0 %v64
  %94 = vmatpush.msra.mxu0 %v63
  %95 = vmatmul.f32.gmra.mxu0 %v47
  %v96 = vpop.f32.mrf.mxu0
  %v97 = vadd.f32 0.0, %v96
  %98 = vmatmul.f32.gmra.mxu0 %v48
  %v99 = vpop.f32.mrf.mxu0
  %v100 = vadd.f32 0.0, %v99
  %101 = vmatmul.f32.gmra.mxu0 %v49
  %v102 = vpop.f32.mrf.mxu0
  %v103 = vadd.f32 0.0, %v102
  %104 = vmatmul.f32.gmra.mxu0 %v50
  %v105 = vpop.f32.mrf.mxu0
  %v106 = vadd.f32 0.0, %v105
  %107 = vmatmul.f32.gmra.mxu0 %v51
  %v108 = vpop.f32.mrf.mxu0
  %v109 = vadd.f32 0.0, %v108
  %110 = vmatmul.f32.gmra.mxu0 %v52
  %v111 = vpop.f32.mrf.mxu0
  %v112 = vadd.f32 0.0, %v111
  %113 = vmatmul.f32.gmra.mxu0 %v53
  %v114 = vpop.f32.mrf.mxu0
  %v115 = vadd.f32 0.0, %v114
  %116 = vmatmul.f32.gmra.mxu0 %v54
  %v117 = vpop.f32.mrf.mxu0
  %v118 = vadd.f32 0.0, %v117
  %119 = vmatmul.f32.gmra.mxu0 %v55
  %v120 = vpop.f32.mrf.mxu0
  %v121 = vadd.f32 0.0, %v120
  %122 = vmatmul.f32.gmra.mxu0 %v56
  %v123 = vpop.f32.mrf.mxu0
  %v124 = vadd.f32 0.0, %v123
  %125 = vmatmul.f32.gmra.mxu0 %v57
  %v126 = vpop.f32.mrf.mxu0
  %v127 = vadd.f32 0.0, %v126
  %128 = vmatmul.f32.gmra.mxu0 %v58
  %v129 = vpop.f32.mrf.mxu0
  %v130 = vadd.f32 0.0, %v129
  %131 = vmatmul.f32.gmra.mxu0 %v59
  %v132 = vpop.f32.mrf.mxu0
  %v133 = vadd.f32 0.0, %v132
  %134 = vmatmul.f32.gmra.mxu0 %v60
  %v135 = vpop.f32.mrf.mxu0
  %v136 = vadd.f32 0.0, %v135
  %137 = vmatmul.f32.gmra.mxu0 %v61
  %v138 = vpop.f32.mrf.mxu0
  %v139 = vadd.f32 0.0, %v138
  %140 = vmatmul.f32.gmra.mxu0 %v62
  %v141 = vpop.f32.mrf.mxu0
  %v142 = vadd.f32 0.0, %v141
  %143 = vdwg.mxu0
  %v144 = vadd.f32 %v31, %v97
  %v145 = vadd.f32 %v32, %v100
  %v146 = vadd.f32 %v33, %v103
  %v147 = vadd.f32 %v34, %v106
  %v148 = vadd.f32 %v35, %v109
  %v149 = vadd.f32 %v36, %v112
  %v150 = vadd.f32 %v37, %v115
  %v151 = vadd.f32 %v38, %v118
  %v152 = vadd.f32 %v39, %v121
  %v153 = vadd.f32 %v40, %v124
  %v154 = vadd.f32 %v41, %v127
  %v155 = vadd.f32 %v42, %v130
  %v156 = vadd.f32 %v43, %v133
  %v157 = vadd.f32 %v44, %v136
  %v158 = vadd.f32 %v45, %v139
  %v159 = vadd.f32 %v46, %v142
  %160 = vst [vmem:[%s2] sm:$0xff] %v144
  %161 = vst [vmem:[%s2 + $0x8] sm:$0xff] %v145
  %162 = vst [vmem:[%s2 + $0x10] sm:$0xff] %v146
  %163 = vst [vmem:[%s2 + $0x18] sm:$0xff] %v147
  %164 = vst [vmem:[%s2 + $0x20] sm:$0xff] %v148
  %165 = vst [vmem:[%s2 + $0x28] sm:$0xff] %v149
  %166 = vst [vmem:[%s2 + $0x30] sm:$0xff] %v150
  %167 = vst [vmem:[%s2 + $0x38] sm:$0xff] %v151
  %168 = vst [vmem:[%s2 + $0x40] sm:$0xff] %v152
  %169 = vst [vmem:[%s2 + $0x48] sm:$0xff] %v153
  %170 = vst [vmem:[%s2 + $0x50] sm:$0xff] %v154
  %171 = vst [vmem:[%s2 + $0x58] sm:$0xff] %v155
  %172 = vst [vmem:[%s2 + $0x60] sm:$0xff] %v156
  %173 = vst [vmem:[%s2 + $0x68] sm:$0xff] %v157
  %174 = vst [vmem:[%s2 + $0x70] sm:$0xff] %v158
  %175 = vst [vmem:[%s2 + $0x78] sm:$0xff] %v159
  // Predicated region
  $region14: #{graph_convolution.2} parent=0 // pred_check
    _
  $region15: #{graph_convolution.2} parent=0 // pred_check_branch
    %177 = sbr.rel (0) target = $region17
  $region16: #{graph_convolution.2} parent=0 // pred_region
    _
  $region17: #{graph_convolution.2} parent=0 // pred_fallthru
    _
  // Predicated region
  $region18: #{graph_convolution.2} parent=0 // pred_check
    _
  $region19: #{graph_convolution.2} parent=0 // pred_check_branch
    %179 = sbr.rel (0) target = $region21
  $region20: #{graph_convolution.2} parent=0 // pred_region
    _
  $region21: #{graph_convolution.2} parent=0 // pred_fallthru
    _

// kernel: graph_convolution.3
$region0: #{graph_convolution.3}
  #allocation0 [shape = 'u32[]', space=smem, size = 0x4, offset = 0x4, fixed_abs, tag = 'smem constant byte address 0x4 - core index']
  #allocation1 [shape = 'u32[72,128]{1,0:T(1,128)}', space=vmem, size = 0x9000, scoped, tag = 'internal scratch']
  %s0 = inlined_call_operand.vmem [shape: f32[128,128], index: 0, kind: input, shape index: {}]
  %s1 = inlined_call_operand.vmem [shape: f32[128,128], index: 1, kind: input, shape index: {}]
  %s2 = inlined_call_operand.vmem [shape: f32[1,128], index: 2, kind: input, shape index: {}]
  %s3 = inlined_call_operand.vmem [shape: f32[128,128], index: 3, kind: output, shape index: {}]
  %s4 = sld [smem:[#allocation0]]
  $region30: #{graph_convolution.3} parent=0
    _
  %s6 = ssub.s32 1, %s4
  %s7 = scalar_select 0, %s6, %s4
  // Predicated region
  $region2: #{graph_convolution.3} parent=0 // pred_check
    _
  $region3: #{graph_convolution.3} parent=0 // pred_check_branch
    %9 = sbr.rel (0) target = $region5
  $region4: #{graph_convolution.3} parent=0 // pred_region
    _
  $region5: #{graph_convolution.3} parent=0 // pred_fallthru
    _
  // Predicated region
  $region6: #{graph_convolution.3} parent=0 // pred_check
    _
  $region7: #{graph_convolution.3} parent=0 // pred_check_branch
    %11 = sbr.rel (0) target = $region9
  $region8: #{graph_convolution.3} parent=0 // pred_region
    _
  $region9: #{graph_convolution.3} parent=0 // pred_fallthru
    _
  // Predicated region
  $region10: #{graph_convolution.3} parent=0 // pred_check
    _
  $region11: #{graph_convolution.3} parent=0 // pred_check_branch
    %13 = sbr.rel (0) target = $region13
  $region12: #{graph_convolution.3} parent=0 // pred_region
    _
  $region13: #{graph_convolution.3} parent=0 // pred_fallthru
    _
  %p14 = scmp.eq.s32.totalorder 0, 0
  // Predicated region
  $region14: #{graph_convolution.3} parent=0 // pred_check
    %p15 = pneg %p14
  $region15: #{graph_convolution.3} parent=0 // pred_check_branch
    %17 = sbr.rel (%p15) target = $region17
  $region16: #{graph_convolution.3} parent=0 // pred_region
    %18 = vst [vmem:[%s3] sm:$0xff] 0.0
    %19 = vst [vmem:[%s3 + $0x8] sm:$0xff] 0.0
    %20 = vst [vmem:[%s3 + $0x10] sm:$0xff] 0.0
    %21 = vst [vmem:[%s3 + $0x18] sm:$0xff] 0.0
    %22 = vst [vmem:[%s3 + $0x20] sm:$0xff] 0.0
    %23 = vst [vmem:[%s3 + $0x28] sm:$0xff] 0.0
    %24 = vst [vmem:[%s3 + $0x30] sm:$0xff] 0.0
    %25 = vst [vmem:[%s3 + $0x38] sm:$0xff] 0.0
    %26 = vst [vmem:[%s3 + $0x40] sm:$0xff] 0.0
    %27 = vst [vmem:[%s3 + $0x48] sm:$0xff] 0.0
    %28 = vst [vmem:[%s3 + $0x50] sm:$0xff] 0.0
    %29 = vst [vmem:[%s3 + $0x58] sm:$0xff] 0.0
    %30 = vst [vmem:[%s3 + $0x60] sm:$0xff] 0.0
    %31 = vst [vmem:[%s3 + $0x68] sm:$0xff] 0.0
    %32 = vst [vmem:[%s3 + $0x70] sm:$0xff] 0.0
    %33 = vst [vmem:[%s3 + $0x78] sm:$0xff] 0.0
  $region17: #{graph_convolution.3} parent=0 // pred_fallthru
    _
  %v34 = vld [vmem:[%s3] sm:$0xff]
  %v35 = vld [vmem:[%s3 + $0x8] sm:$0xff]
  %v36 = vld [vmem:[%s3 + $0x10] sm:$0xff]
  %v37 = vld [vmem:[%s3 + $0x18] sm:$0xff]
  %v38 = vld [vmem:[%s3 + $0x20] sm:$0xff]
  %v39 = vld [vmem:[%s3 + $0x28] sm:$0xff]
  %v40 = vld [vmem:[%s3 + $0x30] sm:$0xff]
  %v41 = vld [vmem:[%s3 + $0x38] sm:$0xff]
  %v42 = vld [vmem:[%s3 + $0x40] sm:$0xff]
  %v43 = vld [vmem:[%s3 + $0x48] sm:$0xff]
  %v44 = vld [vmem:[%s3 + $0x50] sm:$0xff]
  %v45 = vld [vmem:[%s3 + $0x58] sm:$0xff]
  %v46 = vld [vmem:[%s3 + $0x60] sm:$0xff]
  %v47 = vld [vmem:[%s3 + $0x68] sm:$0xff]
  %v48 = vld [vmem:[%s3 + $0x70] sm:$0xff]
  %v49 = vld [vmem:[%s3 + $0x78] sm:$0xff]
  %v50 = vld [vmem:[%s0] sm:$0xff]
  %v51 = vld [vmem:[%s0 + $0x8] sm:$0xff]
  %v52 = vld [vmem:[%s0 + $0x10] sm:$0xff]
  %v53 = vld [vmem:[%s0 + $0x18] sm:$0xff]
  %v54 = vld [vmem:[%s0 + $0x20] sm:$0xff]
  %v55 = vld [vmem:[%s0 + $0x28] sm:$0xff]
  %v56 = vld [vmem:[%s0 + $0x30] sm:$0xff]
  %v57 = vld [vmem:[%s0 + $0x38] sm:$0xff]
  %v58 = vld [vmem:[%s0 + $0x40] sm:$0xff]
  %v59 = vld [vmem:[%s0 + $0x48] sm:$0xff]
  %v60 = vld [vmem:[%s0 + $0x50] sm:$0xff]
  %v61 = vld [vmem:[%s0 + $0x58] sm:$0xff]
  %v62 = vld [vmem:[%s0 + $0x60] sm:$0xff]
  %v63 = vld [vmem:[%s0 + $0x68] sm:$0xff]
  %v64 = vld [vmem:[%s0 + $0x70] sm:$0xff]
  %v65 = vld [vmem:[%s0 + $0x78] sm:$0xff]
  %v66 = vld [vmem:[%s1] sm:$0xff]
  %v67 = vld [vmem:[%s1 + $0x8] sm:$0xff]
  %v68 = vld [vmem:[%s1 + $0x10] sm:$0xff]
  %v69 = vld [vmem:[%s1 + $0x18] sm:$0xff]
  %v70 = vld [vmem:[%s1 + $0x20] sm:$0xff]
  %v71 = vld [vmem:[%s1 + $0x28] sm:$0xff]
  %v72 = vld [vmem:[%s1 + $0x30] sm:$0xff]
  %v73 = vld [vmem:[%s1 + $0x38] sm:$0xff]
  %v74 = vld [vmem:[%s1 + $0x40] sm:$0xff]
  %v75 = vld [vmem:[%s1 + $0x48] sm:$0xff]
  %v76 = vld [vmem:[%s1 + $0x50] sm:$0xff]
  %v77 = vld [vmem:[%s1 + $0x58] sm:$0xff]
  %v78 = vld [vmem:[%s1 + $0x60] sm:$0xff]
  %v79 = vld [vmem:[%s1 + $0x68] sm:$0xff]
  %v80 = vld [vmem:[%s1 + $0x70] sm:$0xff]
  %v81 = vld [vmem:[%s1 + $0x78] sm:$0xff]
  %82 = vmatpush.msra.mxu0 %v81
  %83 = vmatpush.msra.mxu0 %v80
  %84 = vmatpush.msra.mxu0 %v79
  %85 = vmatpush.msra.mxu0 %v78
  %86 = vmatpush.msra.mxu0 %v77
  %87 = vmatpush.msra.mxu0 %v76
  %88 = vmatpush.msra.mxu0 %v75
  %89 = vmatpush.msra.mxu0 %v74
  %90 = vmatpush.msra.mxu0 %v73
  %91 = vmatpush.msra.mxu0 %v72
  %92 = vmatpush.msra.mxu0 %v71
  %93 = vmatpush.msra.mxu0 %v70
  %94 = vmatpush.msra.mxu0 %v69
  %95 = vmatpush.msra.mxu0 %v68
  %96 = vmatpush.msra.mxu0 %v67
  %97 = vmatpush.msra.mxu0 %v66
  %98 = vmatmul.f32.gmra.mxu0 %v50
  %v99 = vpop.f32.mrf.mxu0
  %v100 = vadd.f32 0.0, %v99
  %101 = vmatmul.f32.gmra.mxu0 %v51
  %v102 = vpop.f32.mrf.mxu0
  %v103 = vadd.f32 0.0, %v102
  %104 = vmatmul.f32.gmra.mxu0 %v52
  %v105 = vpop.f32.mrf.mxu0
  %v106 = vadd.f32 0.0, %v105
  %107 = vmatmul.f32.gmra.mxu0 %v53
  %v108 = vpop.f32.mrf.mxu0
  %v109 = vadd.f32 0.0, %v108
  %110 = vmatmul.f32.gmra.mxu0 %v54
  %v111 = vpop.f32.mrf.mxu0
  %v112 = vadd.f32 0.0, %v111
  %113 = vmatmul.f32.gmra.mxu0 %v55
  %v114 = vpop.f32.mrf.mxu0
  %v115 = vadd.f32 0.0, %v114
  %116 = vmatmul.f32.gmra.mxu0 %v56
  %v117 = vpop.f32.mrf.mxu0
  %v118 = vadd.f32 0.0, %v117
  %119 = vmatmul.f32.gmra.mxu0 %v57
  %v120 = vpop.f32.mrf.mxu0
  %v121 = vadd.f32 0.0, %v120
  %122 = vmatmul.f32.gmra.mxu0 %v58
  %v123 = vpop.f32.mrf.mxu0
  %v124 = vadd.f32 0.0, %v123
  %125 = vmatmul.f32.gmra.mxu0 %v59
  %v126 = vpop.f32.mrf.mxu0
  %v127 = vadd.f32 0.0, %v126
  %128 = vmatmul.f32.gmra.mxu0 %v60
  %v129 = vpop.f32.mrf.mxu0
  %v130 = vadd.f32 0.0, %v129
  %131 = vmatmul.f32.gmra.mxu0 %v61
  %v132 = vpop.f32.mrf.mxu0
  %v133 = vadd.f32 0.0, %v132
  %134 = vmatmul.f32.gmra.mxu0 %v62
  %v135 = vpop.f32.mrf.mxu0
  %v136 = vadd.f32 0.0, %v135
  %137 = vmatmul.f32.gmra.mxu0 %v63
  %v138 = vpop.f32.mrf.mxu0
  %v139 = vadd.f32 0.0, %v138
  %140 = vmatmul.f32.gmra.mxu0 %v64
  %v141 = vpop.f32.mrf.mxu0
  %v142 = vadd.f32 0.0, %v141
  %143 = vmatmul.f32.gmra.mxu0 %v65
  %v144 = vpop.f32.mrf.mxu0
  %v145 = vadd.f32 0.0, %v144
  %146 = vdwg.mxu0
  %v147 = vadd.f32 %v34, %v100
  %v148 = vadd.f32 %v35, %v103
  %v149 = vadd.f32 %v36, %v106
  %v150 = vadd.f32 %v37, %v109
  %v151 = vadd.f32 %v38, %v112
  %v152 = vadd.f32 %v39, %v115
  %v153 = vadd.f32 %v40, %v118
  %v154 = vadd.f32 %v41, %v121
  %v155 = vadd.f32 %v42, %v124
  %v156 = vadd.f32 %v43, %v127
  %v157 = vadd.f32 %v44, %v130
  %v158 = vadd.f32 %v45, %v133
  %v159 = vadd.f32 %v46, %v136
  %v160 = vadd.f32 %v47, %v139
  %v161 = vadd.f32 %v48, %v142
  %v162 = vadd.f32 %v49, %v145
  %163 = vst [vmem:[%s3] sm:$0xff] %v147
  %164 = vst [vmem:[%s3 + $0x8] sm:$0xff] %v148
  %165 = vst [vmem:[%s3 + $0x10] sm:$0xff] %v149
  %166 = vst [vmem:[%s3 + $0x18] sm:$0xff] %v150
  %167 = vst [vmem:[%s3 + $0x20] sm:$0xff] %v151
  %168 = vst [vmem:[%s3 + $0x28] sm:$0xff] %v152
  %169 = vst [vmem:[%s3 + $0x30] sm:$0xff] %v153
  %170 = vst [vmem:[%s3 + $0x38] sm:$0xff] %v154
  %171 = vst [vmem:[%s3 + $0x40] sm:$0xff] %v155
  %172 = vst [vmem:[%s3 + $0x48] sm:$0xff] %v156
  %173 = vst [vmem:[%s3 + $0x50] sm:$0xff] %v157
  %174 = vst [vmem:[%s3 + $0x58] sm:$0xff] %v158
  %175 = vst [vmem:[%s3 + $0x60] sm:$0xff] %v159
  %176 = vst [vmem:[%s3 + $0x68] sm:$0xff] %v160
  %177 = vst [vmem:[%s3 + $0x70] sm:$0xff] %v161
  %178 = vst [vmem:[%s3 + $0x78] sm:$0xff] %v162
  // Predicated region
  $region18: #{graph_convolution.3} parent=0 // pred_check
    %p179 = pneg %p14
  $region19: #{graph_convolution.3} parent=0 // pred_check_branch
    %181 = sbr.rel (%p179) target = $region21
  $region20: #{graph_convolution.3} parent=0 // pred_region
    %v182 = vld [vmem:[%s3] sm:$0xff]
    %v183 = vld [vmem:[%s3 + $0x8] sm:$0xff]
    %v184 = vld [vmem:[%s3 + $0x10] sm:$0xff]
    %v185 = vld [vmem:[%s3 + $0x18] sm:$0xff]
    %v186 = vld [vmem:[%s3 + $0x20] sm:$0xff]
    %v187 = vld [vmem:[%s3 + $0x28] sm:$0xff]
    %v188 = vld [vmem:[%s3 + $0x30] sm:$0xff]
    %v189 = vld [vmem:[%s3 + $0x38] sm:$0xff]
    %v190 = vld [vmem:[%s3 + $0x40] sm:$0xff]
    %v191 = vld [vmem:[%s3 + $0x48] sm:$0xff]
    %v192 = vld [vmem:[%s3 + $0x50] sm:$0xff]
    %v193 = vld [vmem:[%s3 + $0x58] sm:$0xff]
    %v194 = vld [vmem:[%s3 + $0x60] sm:$0xff]
    %v195 = vld [vmem:[%s3 + $0x68] sm:$0xff]
    %v196 = vld [vmem:[%s3 + $0x70] sm:$0xff]
    %v197 = vld [vmem:[%s3 + $0x78] sm:$0xff]
    %v198 = vld [vmem:[%s2] sm:$0x1]
    %v200 = vperm.slane %v198, 0
    %v202 = vadd.f32 %v182, %v200
    %v203 = vadd.f32 %v183, %v200
    %v204 = vadd.f32 %v184, %v200
    %v205 = vadd.f32 %v185, %v200
    %v206 = vadd.f32 %v186, %v200
    %v207 = vadd.f32 %v187, %v200
    %v208 = vadd.f32 %v188, %v200
    %v209 = vadd.f32 %v189, %v200
    %v210 = vadd.f32 %v190, %v200
    %v211 = vadd.f32 %v191, %v200
    %v212 = vadd.f32 %v192, %v200
    %v213 = vadd.f32 %v193, %v200
    %v214 = vadd.f32 %v194, %v200
    %v215 = vadd.f32 %v195, %v200
    %v216 = vadd.f32 %v196, %v200
    %v217 = vadd.f32 %v197, %v200
    %218 = vst [vmem:[%s3] sm:$0xff] %v202
    %219 = vst [vmem:[%s3 + $0x8] sm:$0xff] %v203
    %220 = vst [vmem:[%s3 + $0x10] sm:$0xff] %v204
    %221 = vst [vmem:[%s3 + $0x18] sm:$0xff] %v205
    %222 = vst [vmem:[%s3 + $0x20] sm:$0xff] %v206
    %223 = vst [vmem:[%s3 + $0x28] sm:$0xff] %v207
    %224 = vst [vmem:[%s3 + $0x30] sm:$0xff] %v208
    %225 = vst [vmem:[%s3 + $0x38] sm:$0xff] %v209
    %226 = vst [vmem:[%s3 + $0x40] sm:$0xff] %v210
    %227 = vst [vmem:[%s3 + $0x48] sm:$0xff] %v211
    %228 = vst [vmem:[%s3 + $0x50] sm:$0xff] %v212
    %229 = vst [vmem:[%s3 + $0x58] sm:$0xff] %v213
    %230 = vst [vmem:[%s3 + $0x60] sm:$0xff] %v214
    %231 = vst [vmem:[%s3 + $0x68] sm:$0xff] %v215
    %232 = vst [vmem:[%s3 + $0x70] sm:$0xff] %v216
    %233 = vst [vmem:[%s3 + $0x78] sm:$0xff] %v217
  $region21: #{graph_convolution.3} parent=0 // pred_fallthru
    _
  // Predicated region
  $region22: #{graph_convolution.3} parent=0 // pred_check
    _
  $region23: #{graph_convolution.3} parent=0 // pred_check_branch
    %235 = sbr.rel (0) target = $region25
  $region24: #{graph_convolution.3} parent=0 // pred_region
    _
  $region25: #{graph_convolution.3} parent=0 // pred_fallthru
    _
  // Predicated region
  $region26: #{graph_convolution.3} parent=0 // pred_check
    _
  $region27: #{graph_convolution.3} parent=0 // pred_check_branch
    %237 = sbr.rel (0) target = $region29
  $region28: #{graph_convolution.3} parent=0 // pred_region
    _
  $region29: #{graph_convolution.3} parent=0 // pred_fallthru
    _

</llo_original>
